<compile_context>
chip_gen: v7x
topology: tpu7x:2x2x1
jax: 0.10.0
libtpu: 0.0.40
codegen_flags: <defaults>
</compile_context>

<pallas_src>
import jax
import jax.numpy as jnp
from jax.experimental import pallas as pl
from jax.experimental.pallas import tpu as pltpu

POSSIBLE_DURATIONS = [5, 10, 30, 40, 50, 60, 70, 80, 90, 100,
                      110, 120, 130, 140, 150, 160, 170, 180]
NUM_DURATIONS = len(POSSIBLE_DURATIONS)

LN_EPS = 1e-5  # PyTorch nn.LayerNorm default

H1, H2, H3 = 128, 256, 128


def _round_up(a, m):
    return ((a + m - 1) // m) * m


def _linear(h, w_ref, b_ref):
    # bf16 x bf16 on the MXU, f32 accumulation, f32 bias add.
    return jnp.dot(h.astype(jnp.bfloat16), w_ref[...],
                   preferred_element_type=jnp.float32) + b_ref[...]


def _layernorm(h, g_ref, b_ref):
    # Row reductions on the MXU (which is otherwise <5% busy for this model):
    # a matmul with an all-ones (H, H) matrix yields the row sum already
    # broadcast across all H lanes, so no XLU cross-lane reduce and no
    # keepdims broadcast is needed.  Two-pass (centered) variance avoids the
    # E[h^2]-mu^2 cancellation issue.
    H = h.shape[-1]
    ones_hh = jnp.full((H, H), 1.0, jnp.bfloat16)
    inv_h = jnp.float32(1.0 / H)
    mu = jnp.dot(h.astype(jnp.bfloat16), ones_hh,
                 preferred_element_type=jnp.float32) * inv_h
    hc = h - mu
    var = jnp.dot((hc * hc).astype(jnp.bfloat16), ones_hh,
                  preferred_element_type=jnp.float32) * inv_h
    return hc * jax.lax.rsqrt(var + LN_EPS) * g_ref[...] + b_ref[...]


def dqn_kernel(x_ref,
               w1_ref, b1_ref, g1_ref, be1_ref,
               w2_ref, b2_ref, g2_ref, be2_ref,
               w3_ref, b3_ref, g3_ref, be3_ref,
               w4_ref, b4_ref,
               out_ref):
    # block 1: Linear(S,128) -> LayerNorm -> ReLU (Dropout = identity, eval)
    h = _linear(x_ref[...], w1_ref, b1_ref)
    h = jnp.maximum(_layernorm(h, g1_ref, be1_ref), 0.0)

    # block 2: Linear(128,256) -> LayerNorm -> ReLU (Dropout = identity, eval)
    h = _linear(h, w2_ref, b2_ref)
    h = jnp.maximum(_layernorm(h, g2_ref, be2_ref), 0.0)

    # block 3: Linear(256,128) -> LayerNorm -> ReLU
    h = _linear(h, w3_ref, b3_ref)
    h = jnp.maximum(_layernorm(h, g3_ref, be3_ref), 0.0)

    # output head: Linear(128, out_dim_padded) -- lane-dense store
    out_ref[...] = _linear(h, w4_ref, b4_ref).astype(out_ref.dtype)


def prepare_params(params):
    """One-time prep (hoisted out of the per-step forward): bf16 weight casts
    and lane-padding of the output head.  Reuse the result across calls."""
    state_size = params["w1"].shape[0]
    out_dim = params["w4"].shape[1]
    out_pad = _round_up(out_dim, 128)
    w4 = jnp.zeros((H3, out_pad), jnp.float32).at[:, :out_dim].set(
        params["w4"]).astype(jnp.bfloat16)
    b4 = jnp.zeros((1, out_pad), jnp.float32).at[:, :out_dim].set(params["b4"])
    return dict(
        w1=params["w1"].astype(jnp.bfloat16), b1=params["b1"],
        g1=params["ln1_g"], be1=params["ln1_b"],
        w2=params["w2"].astype(jnp.bfloat16), b2=params["b2"],
        g2=params["ln2_g"], be2=params["ln2_b"],
        w3=params["w3"].astype(jnp.bfloat16), b3=params["b3"],
        g3=params["ln3_g"], be3=params["ln3_b"],
        w4=w4, b4=b4,
        out_dim=out_dim, out_pad=out_pad, state_size=state_size,
    )


def _pick_tile_b(B):
    # >= 2 grid steps for moderate B (so v7x's two TensorCores both get work
    # under dimension_semantics=("parallel",)) while keeping batch padding
    # small; cap at 512 rows/tile to amortize per-step overhead for large B.
    return min(512, _round_up(max(1, -(-B // 2)), 8))


def enhanced_dqn_forward(x, prep):
    """x: (B, state_size) float32; prep: output of prepare_params(params)."""
    B, S = x.shape
    assert S == prep["state_size"], (S, prep["state_size"])
    out_dim, out_pad = prep["out_dim"], prep["out_pad"]

    tile_b = _pick_tile_b(B)
    b_pad = _round_up(B, tile_b)

    # Stream x in bf16 at its true feature width; pad only the batch dim.
    x_p = x.astype(jnp.bfloat16)
    if b_pad != B:
        x_p = jnp.zeros((b_pad, S), jnp.bfloat16).at[:B].set(x_p)

    operands = (
        x_p,
        prep["w1"], prep["b1"], prep["g1"], prep["be1"],
        prep["w2"], prep["b2"], prep["g2"], prep["be2"],
        prep["w3"], prep["b3"], prep["g3"], prep["be3"],
        prep["w4"], prep["b4"],
    )

    # x / out stream per grid step; weights & LN params stay VMEM-resident.
    def resident(shape):
        return pl.BlockSpec(shape, lambda i: (0, 0))

    in_specs = [
        pl.BlockSpec((tile_b, S), lambda i: (i, 0)),       # x tile (bf16, true S)
        resident((S, H1)),  resident((1, H1)), resident((1, H1)), resident((1, H1)),
        resident((H1, H2)), resident((1, H2)), resident((1, H2)), resident((1, H2)),
        resident((H2, H3)), resident((1, H3)), resident((1, H3)), resident((1, H3)),
        resident((H3, out_pad)), resident((1, out_pad)),
    ]
    out_specs = pl.BlockSpec((tile_b, out_pad), lambda i: (i, 0))

    mm_flops = 2 * b_pad * (S * H1 + H1 * H2 + H2 * H3 + H3 * out_pad)
    ln_flops = 4 * b_pad * (H1 * H1 + H2 * H2 + H3 * H3)   # MXU-based LN reductions
    bytes_accessed = (sum(int(o.size) * o.dtype.itemsize for o in operands)
                      + b_pad * out_pad * 4)

    out_p = pl.pallas_call(
        dqn_kernel,
        out_shape=jax.ShapeDtypeStruct((b_pad, out_pad), jnp.float32),
        grid=(b_pad // tile_b,),
        in_specs=in_specs,
        out_specs=out_specs,
        compiler_params=pltpu.CompilerParams(
            dimension_semantics=("parallel",),   # batch axis shards across TCs
            vmem_limit_bytes=32 << 20),          # footprint is a few MiB; safe everywhere
        cost_estimate=pl.CostEstimate(
            flops=mm_flops + ln_flops,
            transcendentals=3 * b_pad,
            bytes_accessed=bytes_accessed),
    )(*operands)

    # Strip batch / lane padding before anything downstream (e.g. argmax).
    return out_p[:B, :out_dim]


def init_params(key, state_size, num_tl, num_phases):
    """Deterministic synthetic init (PyTorch-like shapes, not a checkpoint)."""
    out_dim = num_tl * num_phases * NUM_DURATIONS
    dims = [(state_size, H1), (H1, H2), (H2, H3), (H3, out_dim)]
    params = {}
    keys = jax.random.split(key, 2 * len(dims))
    for i, (fan_in, fan_out) in enumerate(dims):
        kw, kb = keys[2 * i], keys[2 * i + 1]
        bound = 1.0 / jnp.sqrt(fan_in)
        params[f"w{i+1}"] = jax.random.uniform(
            kw, (fan_in, fan_out), jnp.float32, -bound, bound)
        params[f"b{i+1}"] = jax.random.uniform(
            kb, (1, fan_out), jnp.float32, -bound, bound)
    # LayerNorm affine params (PyTorch default init: gamma=1, beta=0)
    for name, dim in (("ln1", H1), ("ln2", H2), ("ln3", H3)):
        params[f"{name}_g"] = jnp.ones((1, dim), jnp.float32)
        params[f"{name}_b"] = jnp.zeros((1, dim), jnp.float32)
    return params


def reference_forward(x, params):
    """Pure-JAX reference: bf16 MXU matmuls, exact f32 two-pass LayerNorm."""
    def lin(h, w, b):
        return jnp.dot(h.astype(jnp.bfloat16), w.astype(jnp.bfloat16),
                       preferred_element_type=jnp.float32) + b

    def ln(h, g, b):
        mu = jnp.mean(h, axis=-1, keepdims=True)
        var = jnp.mean((h - mu) ** 2, axis=-1, keepdims=True)
        return (h - mu) / jnp.sqrt(var + LN_EPS) * g + b

    h = jnp.maximum(ln(lin(x, params["w1"], params["b1"]),
                       params["ln1_g"], params["ln1_b"]), 0.0)
    h = jnp.maximum(ln(lin(h, params["w2"], params["b2"]),
                       params["ln2_g"], params["ln2_b"]), 0.0)
    h = jnp.maximum(ln(lin(h, params["w3"], params["b3"]),
                       params["ln3_g"], params["ln3_b"]), 0.0)
    return lin(h, params["w4"], params["b4"])


if __name__ == "__main__":
    # Small shapes consistent with the module's forward.
    batch = 2
    state_size = 32
    num_tl = 2
    num_phases = 4          # output dim = 2 * 4 * 18 = 144

    key = jax.random.PRNGKey(0)
    kx, kp = jax.random.split(key)
    x = jax.random.normal(kx, (batch, state_size), jnp.float32)
    params = init_params(kp, state_size, num_tl, num_phases)

    prep = prepare_params(params)            # one-time weight prep (RL loop reuses)
    q_vals = enhanced_dqn_forward(x, prep)
    q_vals = jax.block_until_ready(q_vals)

    expected_shape = (batch, num_tl * num_phases * NUM_DURATIONS)
    assert q_vals.shape == expected_shape, (q_vals.shape, expected_shape)

    ref = reference_forward(x, params)
    assert jnp.allclose(q_vals, ref, atol=2e-2, rtol=2e-2), \
        "mismatch vs JAX reference"

    print("KERNEL_OK")
</pallas_src>

<mosaic_0001>
module attributes {stable_mosaic.version = 11 : i64} {
  func.func @dqn_kernel(%arg0: i32, %arg1: memref<8x32xbf16, #tpu.memory_space<vmem>>, %arg2: memref<32x128xbf16, #tpu.memory_space<vmem>>, %arg3: memref<1x128xf32, #tpu.memory_space<vmem>>, %arg4: memref<1x128xf32, #tpu.memory_space<vmem>>, %arg5: memref<1x128xf32, #tpu.memory_space<vmem>>, %arg6: memref<128x256xbf16, #tpu.memory_space<vmem>>, %arg7: memref<1x256xf32, #tpu.memory_space<vmem>>, %arg8: memref<1x256xf32, #tpu.memory_space<vmem>>, %arg9: memref<1x256xf32, #tpu.memory_space<vmem>>, %arg10: memref<256x128xbf16, #tpu.memory_space<vmem>>, %arg11: memref<1x128xf32, #tpu.memory_space<vmem>>, %arg12: memref<1x128xf32, #tpu.memory_space<vmem>>, %arg13: memref<1x128xf32, #tpu.memory_space<vmem>>, %arg14: memref<128x256xbf16, #tpu.memory_space<vmem>>, %arg15: memref<1x256xf32, #tpu.memory_space<vmem>>, %arg16: memref<8x256xf32, #tpu.memory_space<vmem>>) attributes {dimension_semantics = [#tpu.dimension_semantics<parallel>], iteration_bounds = array<i64: 1>, scalar_prefetch = 0 : i64, scratch_operands = 0 : i64, tpu.core_type = #tpu.core_type<tc>, window_params = [{transform_indices = @transform_0, window_bounds = array<i64: 8, 32>}, {pipeline_mode = #tpu.pipeline_mode<synchronous>, transform_indices = @transform_1, window_bounds = array<i64: 32, 128>}, {pipeline_mode = #tpu.pipeline_mode<synchronous>, transform_indices = @transform_2, window_bounds = array<i64: 1, 128>}, {pipeline_mode = #tpu.pipeline_mode<synchronous>, transform_indices = @transform_3, window_bounds = array<i64: 1, 128>}, {pipeline_mode = #tpu.pipeline_mode<synchronous>, transform_indices = @transform_4, window_bounds = array<i64: 1, 128>}, {pipeline_mode = #tpu.pipeline_mode<synchronous>, transform_indices = @transform_5, window_bounds = array<i64: 128, 256>}, {pipeline_mode = #tpu.pipeline_mode<synchronous>, transform_indices = @transform_6, window_bounds = array<i64: 1, 256>}, {pipeline_mode = #tpu.pipeline_mode<synchronous>, transform_indices = @transform_7, window_bounds = array<i64: 1, 256>}, {pipeline_mode = #tpu.pipeline_mode<synchronous>, transform_indices = @transform_8, window_bounds = array<i64: 1, 256>}, {pipeline_mode = #tpu.pipeline_mode<synchronous>, transform_indices = @transform_9, window_bounds = array<i64: 256, 128>}, {pipeline_mode = #tpu.pipeline_mode<synchronous>, transform_indices = @transform_10, window_bounds = array<i64: 1, 128>}, {pipeline_mode = #tpu.pipeline_mode<synchronous>, transform_indices = @transform_11, window_bounds = array<i64: 1, 128>}, {pipeline_mode = #tpu.pipeline_mode<synchronous>, transform_indices = @transform_12, window_bounds = array<i64: 1, 128>}, {pipeline_mode = #tpu.pipeline_mode<synchronous>, transform_indices = @transform_13, window_bounds = array<i64: 128, 256>}, {pipeline_mode = #tpu.pipeline_mode<synchronous>, transform_indices = @transform_14, window_bounds = array<i64: 1, 256>}, {transform_indices = @transform_15, window_bounds = array<i64: 8, 256>}]} {
    %c0 = arith.constant 0 : index
    %c0_0 = arith.constant 0 : index
    %0 = vector.load %arg1[%c0, %c0_0] : memref<8x32xbf16, #tpu.memory_space<vmem>>, vector<8x32xbf16>
    %c0_1 = arith.constant 0 : index
    %c0_2 = arith.constant 0 : index
    %1 = vector.load %arg2[%c0_1, %c0_2] : memref<32x128xbf16, #tpu.memory_space<vmem>>, vector<32x128xbf16>
    %cst = arith.constant dense<0.000000e+00> : vector<8x128xf32>
    %2 = tpu.matmul %0, %1, %cst {dimension_numbers = #tpu.dot_dimension_numbers<[1], [0], [0], [1], [0, 0, 1, 1], [], []>} : vector<8x32xbf16>, vector<32x128xbf16>, vector<8x128xf32> -> vector<8x128xf32>
    %c0_3 = arith.constant 0 : index
    %c0_4 = arith.constant 0 : index
    %3 = vector.load %arg3[%c0_3, %c0_4] : memref<1x128xf32, #tpu.memory_space<vmem>>, vector<1x128xf32>
    %4 = vector.broadcast %3 : vector<1x128xf32> to vector<8x128xf32>
    %5 = arith.addf %2, %4 : vector<8x128xf32>
    %cst_5 = arith.constant 1.000000e+00 : bf16
    %6 = vector.broadcast %cst_5 : bf16 to vector<128x128xbf16>
    %7 = arith.truncf %5 : vector<8x128xf32> to vector<8x128xbf16>
    %cst_6 = arith.constant dense<0.000000e+00> : vector<8x128xf32>
    %8 = tpu.matmul %7, %6, %cst_6 {dimension_numbers = #tpu.dot_dimension_numbers<[1], [0], [0], [1], [0, 0, 1, 1], [], []>} : vector<8x128xbf16>, vector<128x128xbf16>, vector<8x128xf32> -> vector<8x128xf32>
    %cst_7 = arith.constant 7.812500e-03 : f32
    %9 = vector.broadcast %cst_7 : f32 to vector<8x128xf32>
    %10 = arith.mulf %8, %9 : vector<8x128xf32>
    %11 = arith.subf %5, %10 : vector<8x128xf32>
    %12 = arith.mulf %11, %11 : vector<8x128xf32>
    %13 = arith.truncf %12 : vector<8x128xf32> to vector<8x128xbf16>
    %cst_8 = arith.constant dense<0.000000e+00> : vector<8x128xf32>
    %14 = tpu.matmul %13, %6, %cst_8 {dimension_numbers = #tpu.dot_dimension_numbers<[1], [0], [0], [1], [0, 0, 1, 1], [], []>} : vector<8x128xbf16>, vector<128x128xbf16>, vector<8x128xf32> -> vector<8x128xf32>
    %cst_9 = arith.constant 7.812500e-03 : f32
    %15 = vector.broadcast %cst_9 : f32 to vector<8x128xf32>
    %16 = arith.mulf %14, %15 : vector<8x128xf32>
    %cst_10 = arith.constant 9.99999974E-6 : f32
    %17 = vector.broadcast %cst_10 : f32 to vector<8x128xf32>
    %18 = arith.addf %16, %17 : vector<8x128xf32>
    %19 = math.rsqrt %18 : vector<8x128xf32>
    %20 = arith.mulf %11, %19 : vector<8x128xf32>
    %c0_11 = arith.constant 0 : index
    %c0_12 = arith.constant 0 : index
    %21 = vector.load %arg4[%c0_11, %c0_12] : memref<1x128xf32, #tpu.memory_space<vmem>>, vector<1x128xf32>
    %22 = vector.broadcast %21 : vector<1x128xf32> to vector<8x128xf32>
    %23 = arith.mulf %20, %22 : vector<8x128xf32>
    %c0_13 = arith.constant 0 : index
    %c0_14 = arith.constant 0 : index
    %24 = vector.load %arg5[%c0_13, %c0_14] : memref<1x128xf32, #tpu.memory_space<vmem>>, vector<1x128xf32>
    %25 = vector.broadcast %24 : vector<1x128xf32> to vector<8x128xf32>
    %26 = arith.addf %23, %25 : vector<8x128xf32>
    %cst_15 = arith.constant 0.000000e+00 : f32
    %27 = vector.broadcast %cst_15 : f32 to vector<8x128xf32>
    %28 = arith.maximumf %26, %27 : vector<8x128xf32>
    %29 = arith.truncf %28 : vector<8x128xf32> to vector<8x128xbf16>
    %c0_16 = arith.constant 0 : index
    %c0_17 = arith.constant 0 : index
    %30 = vector.load %arg6[%c0_16, %c0_17] : memref<128x256xbf16, #tpu.memory_space<vmem>>, vector<128x256xbf16>
    %cst_18 = arith.constant dense<0.000000e+00> : vector<8x256xf32>
    %31 = tpu.matmul %29, %30, %cst_18 {dimension_numbers = #tpu.dot_dimension_numbers<[1], [0], [0], [1], [0, 0, 1, 1], [], []>} : vector<8x128xbf16>, vector<128x256xbf16>, vector<8x256xf32> -> vector<8x256xf32>
    %c0_19 = arith.constant 0 : index
    %c0_20 = arith.constant 0 : index
    %32 = vector.load %arg7[%c0_19, %c0_20] : memref<1x256xf32, #tpu.memory_space<vmem>>, vector<1x256xf32>
    %33 = vector.broadcast %32 : vector<1x256xf32> to vector<8x256xf32>
    %34 = arith.addf %31, %33 : vector<8x256xf32>
    %cst_21 = arith.constant 1.000000e+00 : bf16
    %35 = vector.broadcast %cst_21 : bf16 to vector<256x256xbf16>
    %36 = arith.truncf %34 : vector<8x256xf32> to vector<8x256xbf16>
    %cst_22 = arith.constant dense<0.000000e+00> : vector<8x256xf32>
    %37 = tpu.matmul %36, %35, %cst_22 {dimension_numbers = #tpu.dot_dimension_numbers<[1], [0], [0], [1], [0, 0, 1, 1], [], []>} : vector<8x256xbf16>, vector<256x256xbf16>, vector<8x256xf32> -> vector<8x256xf32>
    %cst_23 = arith.constant 3.906250e-03 : f32
    %38 = vector.broadcast %cst_23 : f32 to vector<8x256xf32>
    %39 = arith.mulf %37, %38 : vector<8x256xf32>
    %40 = arith.subf %34, %39 : vector<8x256xf32>
    %41 = arith.mulf %40, %40 : vector<8x256xf32>
    %42 = arith.truncf %41 : vector<8x256xf32> to vector<8x256xbf16>
    %cst_24 = arith.constant dense<0.000000e+00> : vector<8x256xf32>
    %43 = tpu.matmul %42, %35, %cst_24 {dimension_numbers = #tpu.dot_dimension_numbers<[1], [0], [0], [1], [0, 0, 1, 1], [], []>} : vector<8x256xbf16>, vector<256x256xbf16>, vector<8x256xf32> -> vector<8x256xf32>
    %cst_25 = arith.constant 3.906250e-03 : f32
    %44 = vector.broadcast %cst_25 : f32 to vector<8x256xf32>
    %45 = arith.mulf %43, %44 : vector<8x256xf32>
    %cst_26 = arith.constant 9.99999974E-6 : f32
    %46 = vector.broadcast %cst_26 : f32 to vector<8x256xf32>
    %47 = arith.addf %45, %46 : vector<8x256xf32>
    %48 = math.rsqrt %47 : vector<8x256xf32>
    %49 = arith.mulf %40, %48 : vector<8x256xf32>
    %c0_27 = arith.constant 0 : index
    %c0_28 = arith.constant 0 : index
    %50 = vector.load %arg8[%c0_27, %c0_28] : memref<1x256xf32, #tpu.memory_space<vmem>>, vector<1x256xf32>
    %51 = vector.broadcast %50 : vector<1x256xf32> to vector<8x256xf32>
    %52 = arith.mulf %49, %51 : vector<8x256xf32>
    %c0_29 = arith.constant 0 : index
    %c0_30 = arith.constant 0 : index
    %53 = vector.load %arg9[%c0_29, %c0_30] : memref<1x256xf32, #tpu.memory_space<vmem>>, vector<1x256xf32>
    %54 = vector.broadcast %53 : vector<1x256xf32> to vector<8x256xf32>
    %55 = arith.addf %52, %54 : vector<8x256xf32>
    %cst_31 = arith.constant 0.000000e+00 : f32
    %56 = vector.broadcast %cst_31 : f32 to vector<8x256xf32>
    %57 = arith.maximumf %55, %56 : vector<8x256xf32>
    %58 = arith.truncf %57 : vector<8x256xf32> to vector<8x256xbf16>
    %c0_32 = arith.constant 0 : index
    %c0_33 = arith.constant 0 : index
    %59 = vector.load %arg10[%c0_32, %c0_33] : memref<256x128xbf16, #tpu.memory_space<vmem>>, vector<256x128xbf16>
    %cst_34 = arith.constant dense<0.000000e+00> : vector<8x128xf32>
    %60 = tpu.matmul %58, %59, %cst_34 {dimension_numbers = #tpu.dot_dimension_numbers<[1], [0], [0], [1], [0, 0, 1, 1], [], []>} : vector<8x256xbf16>, vector<256x128xbf16>, vector<8x128xf32> -> vector<8x128xf32>
    %c0_35 = arith.constant 0 : index
    %c0_36 = arith.constant 0 : index
    %61 = vector.load %arg11[%c0_35, %c0_36] : memref<1x128xf32, #tpu.memory_space<vmem>>, vector<1x128xf32>
    %62 = vector.broadcast %61 : vector<1x128xf32> to vector<8x128xf32>
    %63 = arith.addf %60, %62 : vector<8x128xf32>
    %cst_37 = arith.constant 1.000000e+00 : bf16
    %64 = vector.broadcast %cst_37 : bf16 to vector<128x128xbf16>
    %65 = arith.truncf %63 : vector<8x128xf32> to vector<8x128xbf16>
    %cst_38 = arith.constant dense<0.000000e+00> : vector<8x128xf32>
    %66 = tpu.matmul %65, %64, %cst_38 {dimension_numbers = #tpu.dot_dimension_numbers<[1], [0], [0], [1], [0, 0, 1, 1], [], []>} : vector<8x128xbf16>, vector<128x128xbf16>, vector<8x128xf32> -> vector<8x128xf32>
    %cst_39 = arith.constant 7.812500e-03 : f32
    %67 = vector.broadcast %cst_39 : f32 to vector<8x128xf32>
    %68 = arith.mulf %66, %67 : vector<8x128xf32>
    %69 = arith.subf %63, %68 : vector<8x128xf32>
    %70 = arith.mulf %69, %69 : vector<8x128xf32>
    %71 = arith.truncf %70 : vector<8x128xf32> to vector<8x128xbf16>
    %cst_40 = arith.constant dense<0.000000e+00> : vector<8x128xf32>
    %72 = tpu.matmul %71, %64, %cst_40 {dimension_numbers = #tpu.dot_dimension_numbers<[1], [0], [0], [1], [0, 0, 1, 1], [], []>} : vector<8x128xbf16>, vector<128x128xbf16>, vector<8x128xf32> -> vector<8x128xf32>
    %cst_41 = arith.constant 7.812500e-03 : f32
    %73 = vector.broadcast %cst_41 : f32 to vector<8x128xf32>
    %74 = arith.mulf %72, %73 : vector<8x128xf32>
    %cst_42 = arith.constant 9.99999974E-6 : f32
    %75 = vector.broadcast %cst_42 : f32 to vector<8x128xf32>
    %76 = arith.addf %74, %75 : vector<8x128xf32>
    %77 = math.rsqrt %76 : vector<8x128xf32>
    %78 = arith.mulf %69, %77 : vector<8x128xf32>
    %c0_43 = arith.constant 0 : index
    %c0_44 = arith.constant 0 : index
    %79 = vector.load %arg12[%c0_43, %c0_44] : memref<1x128xf32, #tpu.memory_space<vmem>>, vector<1x128xf32>
    %80 = vector.broadcast %79 : vector<1x128xf32> to vector<8x128xf32>
    %81 = arith.mulf %78, %80 : vector<8x128xf32>
    %c0_45 = arith.constant 0 : index
    %c0_46 = arith.constant 0 : index
    %82 = vector.load %arg13[%c0_45, %c0_46] : memref<1x128xf32, #tpu.memory_space<vmem>>, vector<1x128xf32>
    %83 = vector.broadcast %82 : vector<1x128xf32> to vector<8x128xf32>
    %84 = arith.addf %81, %83 : vector<8x128xf32>
    %cst_47 = arith.constant 0.000000e+00 : f32
    %85 = vector.broadcast %cst_47 : f32 to vector<8x128xf32>
    %86 = arith.maximumf %84, %85 : vector<8x128xf32>
    %87 = arith.truncf %86 : vector<8x128xf32> to vector<8x128xbf16>
    %c0_48 = arith.constant 0 : index
    %c0_49 = arith.constant 0 : index
    %88 = vector.load %arg14[%c0_48, %c0_49] : memref<128x256xbf16, #tpu.memory_space<vmem>>, vector<128x256xbf16>
    %cst_50 = arith.constant dense<0.000000e+00> : vector<8x256xf32>
    %89 = tpu.matmul %87, %88, %cst_50 {dimension_numbers = #tpu.dot_dimension_numbers<[1], [0], [0], [1], [0, 0, 1, 1], [], []>} : vector<8x128xbf16>, vector<128x256xbf16>, vector<8x256xf32> -> vector<8x256xf32>
    %c0_51 = arith.constant 0 : index
    %c0_52 = arith.constant 0 : index
    %90 = vector.load %arg15[%c0_51, %c0_52] : memref<1x256xf32, #tpu.memory_space<vmem>>, vector<1x256xf32>
    %91 = vector.broadcast %90 : vector<1x256xf32> to vector<8x256xf32>
    %92 = arith.addf %89, %91 : vector<8x256xf32>
    %c0_53 = arith.constant 0 : index
    %c0_54 = arith.constant 0 : index
    %93 = vector.load %arg16[%c0_53, %c0_54] : memref<8x256xf32, #tpu.memory_space<vmem>>, vector<8x256xf32>
    tpu.vector_store %arg16[%c0_53, %c0_54], %92 {strides = array<i32>} : memref<8x256xf32, #tpu.memory_space<vmem>>, vector<8x256xf32>,
    return
  }
  func.func @transform_0(%arg0: i32) -> (i32, i32) {
    %c0_i32 = arith.constant 0 : i32
    %c0_i32_0 = arith.constant 0 : i32
    return %arg0, %c0_i32 : i32, i32
  }
  func.func @transform_1(%arg0: i32) -> (i32, i32) {
    %c0_i32 = arith.constant 0 : i32
    %c0_i32_0 = arith.constant 0 : i32
    %c0_i32_1 = arith.constant 0 : i32
    return %c0_i32, %c0_i32_0 : i32, i32
  }
  func.func @transform_2(%arg0: i32) -> (i32, i32) {
    %c0_i32 = arith.constant 0 : i32
    %c0_i32_0 = arith.constant 0 : i32
    %c0_i32_1 = arith.constant 0 : i32
    return %c0_i32, %c0_i32_0 : i32, i32
  }
  func.func @transform_3(%arg0: i32) -> (i32, i32) {
    %c0_i32 = arith.constant 0 : i32
    %c0_i32_0 = arith.constant 0 : i32
    %c0_i32_1 = arith.constant 0 : i32
    return %c0_i32, %c0_i32_0 : i32, i32
  }
  func.func @transform_4(%arg0: i32) -> (i32, i32) {
    %c0_i32 = arith.constant 0 : i32
    %c0_i32_0 = arith.constant 0 : i32
    %c0_i32_1 = arith.constant 0 : i32
    return %c0_i32, %c0_i32_0 : i32, i32
  }
  func.func @transform_5(%arg0: i32) -> (i32, i32) {
    %c0_i32 = arith.constant 0 : i32
    %c0_i32_0 = arith.constant 0 : i32
    %c0_i32_1 = arith.constant 0 : i32
    return %c0_i32, %c0_i32_0 : i32, i32
  }
  func.func @transform_6(%arg0: i32) -> (i32, i32) {
    %c0_i32 = arith.constant 0 : i32
    %c0_i32_0 = arith.constant 0 : i32
    %c0_i32_1 = arith.constant 0 : i32
    return %c0_i32, %c0_i32_0 : i32, i32
  }
  func.func @transform_7(%arg0: i32) -> (i32, i32) {
    %c0_i32 = arith.constant 0 : i32
    %c0_i32_0 = arith.constant 0 : i32
    %c0_i32_1 = arith.constant 0 : i32
    return %c0_i32, %c0_i32_0 : i32, i32
  }
  func.func @transform_8(%arg0: i32) -> (i32, i32) {
    %c0_i32 = arith.constant 0 : i32
    %c0_i32_0 = arith.constant 0 : i32
    %c0_i32_1 = arith.constant 0 : i32
    return %c0_i32, %c0_i32_0 : i32, i32
  }
  func.func @transform_9(%arg0: i32) -> (i32, i32) {
    %c0_i32 = arith.constant 0 : i32
    %c0_i32_0 = arith.constant 0 : i32
    %c0_i32_1 = arith.constant 0 : i32
    return %c0_i32, %c0_i32_0 : i32, i32
  }
  func.func @transform_10(%arg0: i32) -> (i32, i32) {
    %c0_i32 = arith.constant 0 : i32
    %c0_i32_0 = arith.constant 0 : i32
    %c0_i32_1 = arith.constant 0 : i32
    return %c0_i32, %c0_i32_0 : i32, i32
  }
  func.func @transform_11(%arg0: i32) -> (i32, i32) {
    %c0_i32 = arith.constant 0 : i32
    %c0_i32_0 = arith.constant 0 : i32
    %c0_i32_1 = arith.constant 0 : i32
    return %c0_i32, %c0_i32_0 : i32, i32
  }
  func.func @transform_12(%arg0: i32) -> (i32, i32) {
    %c0_i32 = arith.constant 0 : i32
    %c0_i32_0 = arith.constant 0 : i32
    %c0_i32_1 = arith.constant 0 : i32
    return %c0_i32, %c0_i32_0 : i32, i32
  }
  func.func @transform_13(%arg0: i32) -> (i32, i32) {
    %c0_i32 = arith.constant 0 : i32
    %c0_i32_0 = arith.constant 0 : i32
    %c0_i32_1 = arith.constant 0 : i32
    return %c0_i32, %c0_i32_0 : i32, i32
  }
  func.func @transform_14(%arg0: i32) -> (i32, i32) {
    %c0_i32 = arith.constant 0 : i32
    %c0_i32_0 = arith.constant 0 : i32
    %c0_i32_1 = arith.constant 0 : i32
    return %c0_i32, %c0_i32_0 : i32, i32
  }
  func.func @transform_15(%arg0: i32) -> (i32, i32) {
    %c0_i32 = arith.constant 0 : i32
    %c0_i32_0 = arith.constant 0 : i32
    return %arg0, %c0_i32 : i32, i32
  }
}

</mosaic_0001>

<llo_original>
// kernel: tpu_custom_call.1
$region0: #{tpu_custom_call.1}
  #allocation0 [shape = 'u32[]', space=smem, size = 0x4, offset = 0x4, fixed_abs, tag = 'smem constant byte address 0x4 - core index']
  #allocation1 [shape = 'u32[144,128]{1,0:T(1,128)}', space=vmem, size = 0x12000, scoped, tag = 'internal scratch']
  %s0 = inlined_call_operand.hbm [shape: bf16[8,32], index: 0, kind: input, shape index: {}]
  %s1 = inlined_call_operand.hbm [shape: bf16[32,128], index: 1, kind: input, shape index: {}]
  %s2 = inlined_call_operand.vmem [shape: f32[1,128], index: 2, kind: input, shape index: {}]
  %s3 = inlined_call_operand.vmem [shape: f32[1,128], index: 3, kind: input, shape index: {}]
  %s4 = inlined_call_operand.vmem [shape: f32[1,128], index: 4, kind: input, shape index: {}]
  %s5 = inlined_call_operand.hbm [shape: bf16[128,256], index: 5, kind: input, shape index: {}]
  %s6 = inlined_call_operand.vmem [shape: f32[1,256], index: 6, kind: input, shape index: {}]
  %s7 = inlined_call_operand.vmem [shape: f32[1,256], index: 7, kind: input, shape index: {}]
  %s8 = inlined_call_operand.vmem [shape: f32[1,256], index: 8, kind: input, shape index: {}]
  %s9 = inlined_call_operand.hbm [shape: bf16[256,128], index: 9, kind: input, shape index: {}]
  %s10 = inlined_call_operand.vmem [shape: f32[1,128], index: 10, kind: input, shape index: {}]
  %s11 = inlined_call_operand.vmem [shape: f32[1,128], index: 11, kind: input, shape index: {}]
  %s12 = inlined_call_operand.vmem [shape: f32[1,128], index: 12, kind: input, shape index: {}]
  %s13 = inlined_call_operand.hbm [shape: bf16[128,256], index: 13, kind: input, shape index: {}]
  %s14 = inlined_call_operand.vmem [shape: f32[1,256], index: 14, kind: input, shape index: {}]
  %s15 = inlined_call_operand.hbm [shape: f32[8,256], index: 15, kind: output, shape index: {}]
  %s16 = sld [smem:[#allocation0]]
  $region90: #{tpu_custom_call.1} parent=0
    _
  %s18 = ssub.s32 1, %s16
  %s19 = scalar_select 0, %s18, %s16
  $region1: #{tpu_custom_call.1} parent=0
    #allocation2 [shape = 'u8[2048]{0}', space=vmem, size = 0x800, scoped, tag = 'input window, operand 0, single buffered']
    #allocation3 [shape = 's32[1]{0}', space=sflag, size = 0x4, scoped, tag = 'scoped memory for tpu_custom_call.1']
    #allocation4 [shape = 's32[1]{0}', space=sflag, size = 0x4, scoped, tag = 'scoped memory for tpu_custom_call.1']
    #allocation5 [shape = 'u8[8192]{0}', space=vmem, size = 0x2000, scoped, tag = 'input window, operand 1, single buffered']
    #allocation6 [shape = 's32[1]{0}', space=sflag, size = 0x4, scoped, tag = 'scoped memory for tpu_custom_call.1']
    #allocation7 [shape = 'u8[65536]{0}', space=vmem, size = 0x10000, scoped, tag = 'input window, operand 5, single buffered']
    #allocation8 [shape = 'u8[65536]{0}', space=vmem, size = 0x10000, scoped, tag = 'input window, operand 9, single buffered']
    #allocation9 [shape = 's32[1]{0}', space=sflag, size = 0x4, scoped, tag = 'scoped memory for tpu_custom_call.1']
    #allocation10 [shape = 'u8[65536]{0}', space=vmem, size = 0x10000, scoped, tag = 'input window, operand 13, single buffered']
    #allocation11 [shape = 'u8[8192]{0}', space=vmem, size = 0x2000, scoped, tag = 'output window, operand 0, single buffered']
    %20 = vsyncpa [#allocation3], 0
    %21 = vsyncpa [#allocation6], 0
    %22 = vsyncpa [#allocation9], 0
    %23 = vsyncpa [#allocation4], 0
    // Predicated region
    $region2: #{tpu_custom_call.1} parent=1 // pred_check
      _
    $region3: #{tpu_custom_call.1} parent=1 // pred_check_branch
      %25 = sbr.rel (0) target = $region5
    $region4: #{tpu_custom_call.1} parent=1 // pred_region
      %s27 = ssub.s32 64, 64
      %28 = vsyncadd [#allocation3], %s27
      %s30 = sshll.u32 [#allocation2], 4
      %s31 = int_to_ptr.vmem [resolvable:$true] %s30
      %33 = dma.hbm_to_vmem [thread:$0]  %s0, 64, %s31, [#allocation3]
    $region5: #{tpu_custom_call.1} parent=1 // pred_fallthru
      _
    // Predicated region
    $region6: #{tpu_custom_call.1} parent=1 // pred_check
      _
    $region7: #{tpu_custom_call.1} parent=1 // pred_check_branch
      %35 = sbr.rel (0) target = $region9
    $region8: #{tpu_custom_call.1} parent=1 // pred_region
      %s37 = ssub.s32 256, 256
      %38 = vsyncadd [#allocation6], %s37
      %s39 = sshll.u32 [#allocation5], 4
      %s40 = int_to_ptr.vmem [resolvable:$true] %s39
      %45 = dma.hbm_to_vmem [thread:$0]  %s1, 256, %s40, [#allocation6], 64, 64, 4
    $region9: #{tpu_custom_call.1} parent=1 // pred_fallthru
      _
    // Predicated region
    $region10: #{tpu_custom_call.1} parent=1 // pred_check
      _
    $region11: #{tpu_custom_call.1} parent=1 // pred_check_branch
      %47 = sbr.rel (0) target = $region13
    $region12: #{tpu_custom_call.1} parent=1 // pred_region
      _
    $region13: #{tpu_custom_call.1} parent=1 // pred_fallthru
      _
    // Predicated region
    $region14: #{tpu_custom_call.1} parent=1 // pred_check
      _
    $region15: #{tpu_custom_call.1} parent=1 // pred_check_branch
      %49 = sbr.rel (0) target = $region17
    $region16: #{tpu_custom_call.1} parent=1 // pred_region
      _
    $region17: #{tpu_custom_call.1} parent=1 // pred_fallthru
      _
    // Predicated region
    $region18: #{tpu_custom_call.1} parent=1 // pred_check
      _
    $region19: #{tpu_custom_call.1} parent=1 // pred_check_branch
      %51 = sbr.rel (0) target = $region21
    $region20: #{tpu_custom_call.1} parent=1 // pred_region
      _
    $region21: #{tpu_custom_call.1} parent=1 // pred_fallthru
      _
    // Predicated region
    $region22: #{tpu_custom_call.1} parent=1 // pred_check
      _
    $region23: #{tpu_custom_call.1} parent=1 // pred_check_branch
      %53 = sbr.rel (0) target = $region25
    $region24: #{tpu_custom_call.1} parent=1 // pred_region
      %s55 = ssub.s32 2048, 2048
      %56 = vsyncadd [#allocation6], %s55
      %s57 = sshll.u32 [#allocation7], 4
      %s58 = int_to_ptr.vmem [resolvable:$true] %s57
      %63 = dma.hbm_to_vmem [thread:$0]  %s5, 2048, %s58, [#allocation6], 128, 128, 8
    $region25: #{tpu_custom_call.1} parent=1 // pred_fallthru
      _
    // Predicated region
    $region26: #{tpu_custom_call.1} parent=1 // pred_check
      _
    $region27: #{tpu_custom_call.1} parent=1 // pred_check_branch
      %65 = sbr.rel (0) target = $region29
    $region28: #{tpu_custom_call.1} parent=1 // pred_region
      _
    $region29: #{tpu_custom_call.1} parent=1 // pred_fallthru
      _
    // Predicated region
    $region30: #{tpu_custom_call.1} parent=1 // pred_check
      _
    $region31: #{tpu_custom_call.1} parent=1 // pred_check_branch
      %67 = sbr.rel (0) target = $region33
    $region32: #{tpu_custom_call.1} parent=1 // pred_region
      _
    $region33: #{tpu_custom_call.1} parent=1 // pred_fallthru
      _
    // Predicated region
    $region34: #{tpu_custom_call.1} parent=1 // pred_check
      _
    $region35: #{tpu_custom_call.1} parent=1 // pred_check_branch
      %69 = sbr.rel (0) target = $region37
    $region36: #{tpu_custom_call.1} parent=1 // pred_region
      _
    $region37: #{tpu_custom_call.1} parent=1 // pred_fallthru
      _
    // Predicated region
    $region38: #{tpu_custom_call.1} parent=1 // pred_check
      _
    $region39: #{tpu_custom_call.1} parent=1 // pred_check_branch
      %71 = sbr.rel (0) target = $region41
    $region40: #{tpu_custom_call.1} parent=1 // pred_region
      %s73 = ssub.s32 2048, 2048
      %74 = vsyncadd [#allocation9], %s73
      %s75 = sshll.u32 [#allocation8], 4
      %s76 = int_to_ptr.vmem [resolvable:$true] %s75
      %81 = dma.hbm_to_vmem [thread:$0]  %s9, 2048, %s76, [#allocation9], 64, 64, 4
    $region41: #{tpu_custom_call.1} parent=1 // pred_fallthru
      _
    // Predicated region
    $region42: #{tpu_custom_call.1} parent=1 // pred_check
      _
    $region43: #{tpu_custom_call.1} parent=1 // pred_check_branch
      %83 = sbr.rel (0) target = $region45
    $region44: #{tpu_custom_call.1} parent=1 // pred_region
      _
    $region45: #{tpu_custom_call.1} parent=1 // pred_fallthru
      _
    // Predicated region
    $region46: #{tpu_custom_call.1} parent=1 // pred_check
      _
    $region47: #{tpu_custom_call.1} parent=1 // pred_check_branch
      %85 = sbr.rel (0) target = $region49
    $region48: #{tpu_custom_call.1} parent=1 // pred_region
      _
    $region49: #{tpu_custom_call.1} parent=1 // pred_fallthru
      _
    // Predicated region
    $region50: #{tpu_custom_call.1} parent=1 // pred_check
      _
    $region51: #{tpu_custom_call.1} parent=1 // pred_check_branch
      %87 = sbr.rel (0) target = $region53
    $region52: #{tpu_custom_call.1} parent=1 // pred_region
      _
    $region53: #{tpu_custom_call.1} parent=1 // pred_fallthru
      _
    // Predicated region
    $region54: #{tpu_custom_call.1} parent=1 // pred_check
      _
    $region55: #{tpu_custom_call.1} parent=1 // pred_check_branch
      %89 = sbr.rel (0) target = $region57
    $region56: #{tpu_custom_call.1} parent=1 // pred_region
      %s91 = ssub.s32 2048, 2048
      %92 = vsyncadd [#allocation9], %s91
      %s93 = sshll.u32 [#allocation10], 4
      %s94 = int_to_ptr.vmem [resolvable:$true] %s93
      %99 = dma.hbm_to_vmem [thread:$0]  %s13, 2048, %s94, [#allocation9], 128, 128, 8
    $region57: #{tpu_custom_call.1} parent=1 // pred_fallthru
      _
    // Predicated region
    $region58: #{tpu_custom_call.1} parent=1 // pred_check
      _
    $region59: #{tpu_custom_call.1} parent=1 // pred_check_branch
      %101 = sbr.rel (0) target = $region61
    $region60: #{tpu_custom_call.1} parent=1 // pred_region
      _
    $region61: #{tpu_custom_call.1} parent=1 // pred_fallthru
      _
    // Predicated region
    $region62: #{tpu_custom_call.1} parent=1 // pred_check
      _
    $region63: #{tpu_custom_call.1} parent=1 // pred_check_branch
      %103 = sbr.rel (0) target = $region65
    $region64: #{tpu_custom_call.1} parent=1 // pred_region
      %104 = dma.done [#allocation3], 64
    $region65: #{tpu_custom_call.1} parent=1 // pred_fallthru
      _
    // Predicated region
    $region66: #{tpu_custom_call.1} parent=1 // pred_check
      _
    $region67: #{tpu_custom_call.1} parent=1 // pred_check_branch
      %106 = sbr.rel (0) target = $region69
    $region68: #{tpu_custom_call.1} parent=1 // pred_region
      %107 = dma.done [#allocation6], 256
    $region69: #{tpu_custom_call.1} parent=1 // pred_fallthru
      _
    // Predicated region
    $region70: #{tpu_custom_call.1} parent=1 // pred_check
      _
    $region71: #{tpu_custom_call.1} parent=1 // pred_check_branch
      %109 = sbr.rel (0) target = $region73
    $region72: #{tpu_custom_call.1} parent=1 // pred_region
      %110 = dma.done [#allocation6], 2048
    $region73: #{tpu_custom_call.1} parent=1 // pred_fallthru
      _
    // Predicated region
    $region74: #{tpu_custom_call.1} parent=1 // pred_check
      _
    $region75: #{tpu_custom_call.1} parent=1 // pred_check_branch
      %112 = sbr.rel (0) target = $region77
    $region76: #{tpu_custom_call.1} parent=1 // pred_region
      %113 = dma.done [#allocation9], 2048
    $region77: #{tpu_custom_call.1} parent=1 // pred_fallthru
      _
    // Predicated region
    $region78: #{tpu_custom_call.1} parent=1 // pred_check
      _
    $region79: #{tpu_custom_call.1} parent=1 // pred_check_branch
      %115 = sbr.rel (0) target = $region81
    $region80: #{tpu_custom_call.1} parent=1 // pred_region
      %116 = dma.done [#allocation9], 2048
    $region81: #{tpu_custom_call.1} parent=1 // pred_fallthru
      _
    %v119 = vld [vmem:[#allocation2] sm:$0xf]
    %v120 = vld [vmem:[#allocation5] sm:$0xf]
    %v121 = vld [vmem:[#allocation5 + $0x4] sm:$0xf]
    %v122 = vld [vmem:[#allocation5 + $0x8] sm:$0xf]
    %v123 = vld [vmem:[#allocation5 + $0xc] sm:$0xf]
    %v124 = vld [vmem:[%s2] sm:$0x1]
    %v126 = vlaneseq
    %v127 = vshrl.u32 %v126, 7
    %v128 = vsub.s32 0, %v127
    %v129 = vrot.slane %v124, %v128
    %v135 = vunpack.c.l.b16 %v120
    %v136 = vunpack.c.l.b16 %v121
    %v137 = vunpack.c.l.b16 %v122
    %v138 = vunpack.c.l.b16 %v123
    %v139 = vpack.c.b16 %v136, %v135
    %v140 = vpack.c.b16 %v138, %v137
    %vm143 = vcmask 261120
    %v145 = vsel %vm143, %v119, 0
    %147 = vmatprep.subr.bf16.mxu0 0
    %148 = vmatpush1.bf16.msra.mxu0 %v139
    %149 = vmatprep.subr.bf16.mxu0 0
    %150 = vmatpush1.bf16.msra.mxu0 %v140
    %151 = vmatprep.subr.bf16.mxu0 0
    %152 = vmatpush1.bf16.msra.mxu0 0
    %153 = vmatprep.subr.bf16.mxu0 0
    %154 = vmatpush1.bf16.msra.mxu0 0
    %155 = vmatprep.subr.bf16.mxu0 0
    %156 = vmatpush1.bf16.msra.mxu0 0
    %157 = vmatprep.subr.bf16.mxu0 0
    %158 = vmatpush1.bf16.msra.mxu0 0
    %159 = vmatprep.subr.bf16.mxu0 0
    %160 = vmatpush1.bf16.msra.mxu0 0
    %161 = vmatprep.subr.bf16.mxu0 0
    %162 = vmatpush1.bf16.msra.mxu0 0
    %163 = vmatprep.subr.bf16.mxu0 0
    %164 = vmatpush1.bf16.msra.mxu0 0
    %165 = vmatprep.subr.bf16.mxu0 0
    %166 = vmatpush1.bf16.msra.mxu0 0
    %167 = vmatprep.subr.bf16.mxu0 0
    %168 = vmatpush1.bf16.msra.mxu0 0
    %169 = vmatprep.subr.bf16.mxu0 0
    %170 = vmatpush1.bf16.msra.mxu0 0
    %171 = vmatprep.subr.bf16.mxu0 0
    %172 = vmatpush1.bf16.msra.mxu0 0
    %173 = vmatprep.subr.bf16.mxu0 0
    %174 = vmatpush1.bf16.msra.mxu0 0
    %175 = vmatprep.subr.bf16.mxu0 0
    %176 = vmatpush1.bf16.msra.mxu0 0
    %177 = vmatprep.subr.bf16.mxu0 0
    %178 = vmatpush1.bf16.msra.mxu0 0
    %179 = vmatprep.mubr.bf16.mxu0 0
    %180 = vmatmul.mubr.bf16.gmra.mrb[0].mxu0 %v145
    %v181 = vpop.f32.mrb[0].mxu0
    %v182 = vadd.f32 %v129, %v181
    %v183 = vpop.f32.mrb[0].mxu0
    %v184 = vpop.f32.mrb[0].mxu0
    %v185 = vpop.f32.mrb[0].mxu0
    %186 = vdwg.mxu0
    %v187 = vpack.c.bf16 %v182, %v182
    %188 = vmatprep.subr.bf16.mxu0 0
    %189 = vmatpush1.bf16.msra.mxu0 1065369472
    %190 = vmatprep.subr.bf16.mxu0 0
    %191 = vmatpush1.bf16.msra.mxu0 1065369472
    %192 = vmatprep.subr.bf16.mxu0 0
    %193 = vmatpush1.bf16.msra.mxu0 1065369472
    %194 = vmatprep.subr.bf16.mxu0 0
    %195 = vmatpush1.bf16.msra.mxu0 1065369472
    %196 = vmatprep.subr.bf16.mxu0 0
    %197 = vmatpush1.bf16.msra.mxu0 1065369472
    %198 = vmatprep.subr.bf16.mxu0 0
    %199 = vmatpush1.bf16.msra.mxu0 1065369472
    %200 = vmatprep.subr.bf16.mxu0 0
    %201 = vmatpush1.bf16.msra.mxu0 1065369472
    %202 = vmatprep.subr.bf16.mxu0 0
    %203 = vmatpush1.bf16.msra.mxu0 1065369472
    %204 = vmatprep.subr.bf16.mxu0 0
    %205 = vmatpush1.bf16.msra.mxu0 0
    %206 = vmatprep.subr.bf16.mxu0 0
    %207 = vmatpush1.bf16.msra.mxu0 0
    %208 = vmatprep.subr.bf16.mxu0 0
    %209 = vmatpush1.bf16.msra.mxu0 0
    %210 = vmatprep.subr.bf16.mxu0 0
    %211 = vmatpush1.bf16.msra.mxu0 0
    %212 = vmatprep.subr.bf16.mxu0 0
    %213 = vmatpush1.bf16.msra.mxu0 0
    %214 = vmatprep.subr.bf16.mxu0 0
    %215 = vmatpush1.bf16.msra.mxu0 0
    %216 = vmatprep.subr.bf16.mxu0 0
    %217 = vmatpush1.bf16.msra.mxu0 0
    %218 = vmatprep.subr.bf16.mxu0 0
    %219 = vmatpush1.bf16.msra.mxu0 0
    %220 = vmatprep.mubr.bf16.mxu0 0
    %221 = vmatmul.mubr.bf16.gmra.mrb[0].mxu0 %v187
    %v222 = vpop.f32.mrb[0].mxu0
    %v223 = vadd.f32 0.0, %v222
    %v224 = vpop.f32.mrb[0].mxu0
    %v225 = vpop.f32.mrb[0].mxu0
    %v226 = vpop.f32.mrb[0].mxu0
    %227 = vdwg.mxu0
    %v228 = vmul.f32 %v223, 0.0078125
    %v229 = vsub.f32 %v182, %v228
    %v230 = vmul.f32 %v229, %v229
    %v231 = vpack.c.bf16 %v230, %v230
    %232 = vmatprep.subr.bf16.mxu0 0
    %233 = vmatpush1.bf16.msra.mxu0 1065369472
    %234 = vmatprep.subr.bf16.mxu0 0
    %235 = vmatpush1.bf16.msra.mxu0 1065369472
    %236 = vmatprep.subr.bf16.mxu0 0
    %237 = vmatpush1.bf16.msra.mxu0 1065369472
    %238 = vmatprep.subr.bf16.mxu0 0
    %239 = vmatpush1.bf16.msra.mxu0 1065369472
    %240 = vmatprep.subr.bf16.mxu0 0
    %241 = vmatpush1.bf16.msra.mxu0 1065369472
    %242 = vmatprep.subr.bf16.mxu0 0
    %243 = vmatpush1.bf16.msra.mxu0 1065369472
    %244 = vmatprep.subr.bf16.mxu0 0
    %245 = vmatpush1.bf16.msra.mxu0 1065369472
    %246 = vmatprep.subr.bf16.mxu0 0
    %247 = vmatpush1.bf16.msra.mxu0 1065369472
    %248 = vmatprep.subr.bf16.mxu0 0
    %249 = vmatpush1.bf16.msra.mxu0 0
    %250 = vmatprep.subr.bf16.mxu0 0
    %251 = vmatpush1.bf16.msra.mxu0 0
    %252 = vmatprep.subr.bf16.mxu0 0
    %253 = vmatpush1.bf16.msra.mxu0 0
    %254 = vmatprep.subr.bf16.mxu0 0
    %255 = vmatpush1.bf16.msra.mxu0 0
    %256 = vmatprep.subr.bf16.mxu0 0
    %257 = vmatpush1.bf16.msra.mxu0 0
    %258 = vmatprep.subr.bf16.mxu0 0
    %259 = vmatpush1.bf16.msra.mxu0 0
    %260 = vmatprep.subr.bf16.mxu0 0
    %261 = vmatpush1.bf16.msra.mxu0 0
    %262 = vmatprep.subr.bf16.mxu0 0
    %263 = vmatpush1.bf16.msra.mxu0 0
    %264 = vmatprep.mubr.bf16.mxu0 0
    %265 = vmatmul.mubr.bf16.gmra.mrb[0].mxu0 %v231
    %v266 = vpop.f32.mrb[0].mxu0
    %v267 = vadd.f32 0.0, %v266
    %v268 = vpop.f32.mrb[0].mxu0
    %v269 = vpop.f32.mrb[0].mxu0
    %v270 = vpop.f32.mrb[0].mxu0
    %271 = vdwg.mxu0
    %v272 = vmul.f32 %v267, 0.0078125
    %v273 = vadd.f32 %v272, 1e-05
    %v274 = vrsqrt.pop %v273
    %v275 = vmul.f32 %v229, %v274
    %v276 = vld [vmem:[%s3] sm:$0x1]
    %v278 = vlaneseq
    %v279 = vshrl.u32 %v278, 7
    %v280 = vsub.s32 0, %v279
    %v281 = vrot.slane %v276, %v280
    %v283 = vmul.f32 %v275, %v281
    %v284 = vld [vmem:[%s4] sm:$0x1]
    %v286 = vlaneseq
    %v287 = vshrl.u32 %v286, 7
    %v288 = vsub.s32 0, %v287
    %v289 = vrot.slane %v284, %v288
    %v291 = vadd.f32 %v283, %v289
    %v292 = vmax.f32 %v291, 0.0
    %v293 = vpack.c.bf16 %v292, %v292
    %v294 = vld [vmem:[#allocation7] sm:$0xff]
    %v295 = vld [vmem:[#allocation7 + $0x8] sm:$0xff]
    %v296 = vld [vmem:[#allocation7 + $0x10] sm:$0xff]
    %v297 = vld [vmem:[#allocation7 + $0x18] sm:$0xff]
    %v298 = vld [vmem:[#allocation7 + $0x20] sm:$0xff]
    %v299 = vld [vmem:[#allocation7 + $0x28] sm:$0xff]
    %v300 = vld [vmem:[#allocation7 + $0x30] sm:$0xff]
    %v301 = vld [vmem:[#allocation7 + $0x38] sm:$0xff]
    %v302 = vld [vmem:[#allocation7 + $0x40] sm:$0xff]
    %v303 = vld [vmem:[#allocation7 + $0x48] sm:$0xff]
    %v304 = vld [vmem:[#allocation7 + $0x50] sm:$0xff]
    %v305 = vld [vmem:[#allocation7 + $0x58] sm:$0xff]
    %v306 = vld [vmem:[#allocation7 + $0x60] sm:$0xff]
    %v307 = vld [vmem:[#allocation7 + $0x68] sm:$0xff]
    %v308 = vld [vmem:[#allocation7 + $0x70] sm:$0xff]
    %v309 = vld [vmem:[#allocation7 + $0x78] sm:$0xff]
    %v310 = vld [vmem:[%s6] sm:$0x3]
    %v312 = vlaneseq
    %v313 = vshrl.u32 %v312, 7
    %v314 = vsub.s32 0, %v313
    %v315 = vrot.slane %v310, %v314
    %v316 = vlaneseq
    %v317 = vshrl.u32 %v316, 7
    %v318 = vsub.s32 1, %v317
    %v319 = vrot.slane %v310, %v318
    %v338 = vunpack.c.l.b16 %v294
    %v339 = vunpack.c.h.b16 %v294
    %v340 = vunpack.c.l.b16 %v295
    %v341 = vunpack.c.h.b16 %v295
    %v342 = vunpack.c.l.b16 %v296
    %v343 = vunpack.c.h.b16 %v296
    %v344 = vunpack.c.l.b16 %v297
    %v345 = vunpack.c.h.b16 %v297
    %v346 = vunpack.c.l.b16 %v298
    %v347 = vunpack.c.h.b16 %v298
    %v348 = vunpack.c.l.b16 %v299
    %v349 = vunpack.c.h.b16 %v299
    %v350 = vunpack.c.l.b16 %v300
    %v351 = vunpack.c.h.b16 %v300
    %v352 = vunpack.c.l.b16 %v301
    %v353 = vunpack.c.h.b16 %v301
    %v354 = vunpack.c.l.b16 %v302
    %v355 = vunpack.c.h.b16 %v302
    %v356 = vunpack.c.l.b16 %v303
    %v357 = vunpack.c.h.b16 %v303
    %v358 = vunpack.c.l.b16 %v304
    %v359 = vunpack.c.h.b16 %v304
    %v360 = vunpack.c.l.b16 %v305
    %v361 = vunpack.c.h.b16 %v305
    %v362 = vunpack.c.l.b16 %v306
    %v363 = vunpack.c.h.b16 %v306
    %v364 = vunpack.c.l.b16 %v307
    %v365 = vunpack.c.h.b16 %v307
    %v366 = vunpack.c.l.b16 %v308
    %v367 = vunpack.c.h.b16 %v308
    %v368 = vunpack.c.l.b16 %v309
    %v369 = vunpack.c.h.b16 %v309
    %v370 = vpack.c.b16 %v340, %v338
    %v371 = vpack.c.b16 %v341, %v339
    %v372 = vpack.c.b16 %v344, %v342
    %v373 = vpack.c.b16 %v345, %v343
    %v374 = vpack.c.b16 %v348, %v346
    %v375 = vpack.c.b16 %v349, %v347
    %v376 = vpack.c.b16 %v352, %v350
    %v377 = vpack.c.b16 %v353, %v351
    %v378 = vpack.c.b16 %v356, %v354
    %v379 = vpack.c.b16 %v357, %v355
    %v380 = vpack.c.b16 %v360, %v358
    %v381 = vpack.c.b16 %v361, %v359
    %v382 = vpack.c.b16 %v364, %v362
    %v383 = vpack.c.b16 %v365, %v363
    %v384 = vpack.c.b16 %v368, %v366
    %v385 = vpack.c.b16 %v369, %v367
    %402 = vmatprep.subr.bf16.mxu0 %v371
    %403 = vmatpush1.bf16.msra.mxu0 %v370
    %404 = vmatprep.subr.bf16.mxu0 %v373
    %405 = vmatpush1.bf16.msra.mxu0 %v372
    %406 = vmatprep.subr.bf16.mxu0 %v375
    %407 = vmatpush1.bf16.msra.mxu0 %v374
    %408 = vmatprep.subr.bf16.mxu0 %v377
    %409 = vmatpush1.bf16.msra.mxu0 %v376
    %410 = vmatprep.subr.bf16.mxu0 %v379
    %411 = vmatpush1.bf16.msra.mxu0 %v378
    %412 = vmatprep.subr.bf16.mxu0 %v381
    %413 = vmatpush1.bf16.msra.mxu0 %v380
    %414 = vmatprep.subr.bf16.mxu0 %v383
    %415 = vmatpush1.bf16.msra.mxu0 %v382
    %416 = vmatprep.subr.bf16.mxu0 %v385
    %417 = vmatpush1.bf16.msra.mxu0 %v384
    %418 = vmatprep.subr.bf16.mxu0 0
    %419 = vmatpush1.bf16.msra.mxu0 0
    %420 = vmatprep.subr.bf16.mxu0 0
    %421 = vmatpush1.bf16.msra.mxu0 0
    %422 = vmatprep.subr.bf16.mxu0 0
    %423 = vmatpush1.bf16.msra.mxu0 0
    %424 = vmatprep.subr.bf16.mxu0 0
    %425 = vmatpush1.bf16.msra.mxu0 0
    %426 = vmatprep.subr.bf16.mxu0 0
    %427 = vmatpush1.bf16.msra.mxu0 0
    %428 = vmatprep.subr.bf16.mxu0 0
    %429 = vmatpush1.bf16.msra.mxu0 0
    %430 = vmatprep.subr.bf16.mxu0 0
    %431 = vmatpush1.bf16.msra.mxu0 0
    %432 = vmatprep.subr.bf16.mxu0 0
    %433 = vmatpush1.bf16.msra.mxu0 0
    %434 = vmatprep.mubr.bf16.mxu0 0
    %435 = vmatmul.mubr.bf16.gmra.mrb[0].mxu0 %v293
    %v436 = vpop.f32.mrb[0].mxu0
    %v437 = vadd.f32 %v315, %v436
    %v438 = vpop.f32.mrb[0].mxu0
    %v439 = vadd.f32 %v319, %v438
    %v440 = vpop.f32.mrb[0].mxu0
    %v441 = vpop.f32.mrb[0].mxu0
    %442 = vdwg.mxu0
    %v443 = vpack.c.bf16 %v437, %v437
    %v444 = vpack.c.bf16 %v439, %v439
    %445 = vmatprep.subr.bf16.mxu0 1065369472
    %446 = vmatpush1.bf16.msra.mxu0 1065369472
    %447 = vmatprep.subr.bf16.mxu0 1065369472
    %448 = vmatpush1.bf16.msra.mxu0 1065369472
    %449 = vmatprep.subr.bf16.mxu0 1065369472
    %450 = vmatpush1.bf16.msra.mxu0 1065369472
    %451 = vmatprep.subr.bf16.mxu0 1065369472
    %452 = vmatpush1.bf16.msra.mxu0 1065369472
    %453 = vmatprep.subr.bf16.mxu0 1065369472
    %454 = vmatpush1.bf16.msra.mxu0 1065369472
    %455 = vmatprep.subr.bf16.mxu0 1065369472
    %456 = vmatpush1.bf16.msra.mxu0 1065369472
    %457 = vmatprep.subr.bf16.mxu0 1065369472
    %458 = vmatpush1.bf16.msra.mxu0 1065369472
    %459 = vmatprep.subr.bf16.mxu0 1065369472
    %460 = vmatpush1.bf16.msra.mxu0 1065369472
    %461 = vmatprep.subr.bf16.mxu0 1065369472
    %462 = vmatpush1.bf16.msra.mxu0 1065369472
    %463 = vmatprep.subr.bf16.mxu0 1065369472
    %464 = vmatpush1.bf16.msra.mxu0 1065369472
    %465 = vmatprep.subr.bf16.mxu0 1065369472
    %466 = vmatpush1.bf16.msra.mxu0 1065369472
    %467 = vmatprep.subr.bf16.mxu0 1065369472
    %468 = vmatpush1.bf16.msra.mxu0 1065369472
    %469 = vmatprep.subr.bf16.mxu0 1065369472
    %470 = vmatpush1.bf16.msra.mxu0 1065369472
    %471 = vmatprep.subr.bf16.mxu0 1065369472
    %472 = vmatpush1.bf16.msra.mxu0 1065369472
    %473 = vmatprep.subr.bf16.mxu0 1065369472
    %474 = vmatpush1.bf16.msra.mxu0 1065369472
    %475 = vmatprep.subr.bf16.mxu0 1065369472
    %476 = vmatpush1.bf16.msra.mxu0 1065369472
    %477 = vmatprep.mubr.bf16.mxu0 %v444
    %478 = vmatmul.mubr.bf16.gmra.mrb[0].mxu0 %v443
    %v479 = vpop.f32.mrb[0].mxu0
    %v480 = vadd.f32 0.0, %v479
    %v481 = vpop.f32.mrb[0].mxu0
    %v482 = vadd.f32 0.0, %v481
    %v483 = vpop.f32.mrb[0].mxu0
    %v484 = vpop.f32.mrb[0].mxu0
    %485 = vdwg.mxu0
    %v486 = vmul.f32 %v480, 0.00390625
    %v487 = vmul.f32 %v482, 0.00390625
    %v488 = vsub.f32 %v437, %v486
    %v489 = vsub.f32 %v439, %v487
    %v490 = vmul.f32 %v488, %v488
    %v491 = vmul.f32 %v489, %v489
    %v492 = vpack.c.bf16 %v490, %v490
    %v493 = vpack.c.bf16 %v491, %v491
    %494 = vmatprep.subr.bf16.mxu0 1065369472
    %495 = vmatpush1.bf16.msra.mxu0 1065369472
    %496 = vmatprep.subr.bf16.mxu0 1065369472
    %497 = vmatpush1.bf16.msra.mxu0 1065369472
    %498 = vmatprep.subr.bf16.mxu0 1065369472
    %499 = vmatpush1.bf16.msra.mxu0 1065369472
    %500 = vmatprep.subr.bf16.mxu0 1065369472
    %501 = vmatpush1.bf16.msra.mxu0 1065369472
    %502 = vmatprep.subr.bf16.mxu0 1065369472
    %503 = vmatpush1.bf16.msra.mxu0 1065369472
    %504 = vmatprep.subr.bf16.mxu0 1065369472
    %505 = vmatpush1.bf16.msra.mxu0 1065369472
    %506 = vmatprep.subr.bf16.mxu0 1065369472
    %507 = vmatpush1.bf16.msra.mxu0 1065369472
    %508 = vmatprep.subr.bf16.mxu0 1065369472
    %509 = vmatpush1.bf16.msra.mxu0 1065369472
    %510 = vmatprep.subr.bf16.mxu0 1065369472
    %511 = vmatpush1.bf16.msra.mxu0 1065369472
    %512 = vmatprep.subr.bf16.mxu0 1065369472
    %513 = vmatpush1.bf16.msra.mxu0 1065369472
    %514 = vmatprep.subr.bf16.mxu0 1065369472
    %515 = vmatpush1.bf16.msra.mxu0 1065369472
    %516 = vmatprep.subr.bf16.mxu0 1065369472
    %517 = vmatpush1.bf16.msra.mxu0 1065369472
    %518 = vmatprep.subr.bf16.mxu0 1065369472
    %519 = vmatpush1.bf16.msra.mxu0 1065369472
    %520 = vmatprep.subr.bf16.mxu0 1065369472
    %521 = vmatpush1.bf16.msra.mxu0 1065369472
    %522 = vmatprep.subr.bf16.mxu0 1065369472
    %523 = vmatpush1.bf16.msra.mxu0 1065369472
    %524 = vmatprep.subr.bf16.mxu0 1065369472
    %525 = vmatpush1.bf16.msra.mxu0 1065369472
    %526 = vmatprep.mubr.bf16.mxu0 %v493
    %527 = vmatmul.mubr.bf16.gmra.mrb[0].mxu0 %v492
    %v528 = vpop.f32.mrb[0].mxu0
    %v529 = vadd.f32 0.0, %v528
    %v530 = vpop.f32.mrb[0].mxu0
    %v531 = vadd.f32 0.0, %v530
    %v532 = vpop.f32.mrb[0].mxu0
    %v533 = vpop.f32.mrb[0].mxu0
    %534 = vdwg.mxu0
    %v535 = vmul.f32 %v529, 0.00390625
    %v536 = vmul.f32 %v531, 0.00390625
    %v537 = vadd.f32 %v535, 1e-05
    %v538 = vadd.f32 %v536, 1e-05
    %v539 = vrsqrt.pop %v537
    %v540 = vrsqrt.pop %v538
    %v541 = vmul.f32 %v488, %v539
    %v542 = vmul.f32 %v489, %v540
    %v543 = vld [vmem:[%s7] sm:$0x3]
    %v545 = vlaneseq
    %v546 = vshrl.u32 %v545, 7
    %v547 = vsub.s32 0, %v546
    %v548 = vrot.slane %v543, %v547
    %v549 = vlaneseq
    %v550 = vshrl.u32 %v549, 7
    %v551 = vsub.s32 1, %v550
    %v552 = vrot.slane %v543, %v551
    %v555 = vmul.f32 %v541, %v548
    %v556 = vmul.f32 %v542, %v552
    %v557 = vld [vmem:[%s8] sm:$0x3]
    %v559 = vlaneseq
    %v560 = vshrl.u32 %v559, 7
    %v561 = vsub.s32 0, %v560
    %v562 = vrot.slane %v557, %v561
    %v563 = vlaneseq
    %v564 = vshrl.u32 %v563, 7
    %v565 = vsub.s32 1, %v564
    %v566 = vrot.slane %v557, %v565
    %v569 = vadd.f32 %v555, %v562
    %v570 = vadd.f32 %v556, %v566
    %v571 = vmax.f32 %v569, 0.0
    %v572 = vmax.f32 %v570, 0.0
    %v573 = vpack.c.bf16 %v571, %v571
    %v574 = vpack.c.bf16 %v572, %v572
    %v575 = vld [vmem:[#allocation8] sm:$0xf]
    %v576 = vld [vmem:[#allocation8 + $0x4] sm:$0xf]
    %v577 = vld [vmem:[#allocation8 + $0x8] sm:$0xf]
    %v578 = vld [vmem:[#allocation8 + $0xc] sm:$0xf]
    %v579 = vld [vmem:[#allocation8 + $0x10] sm:$0xf]
    %v580 = vld [vmem:[#allocation8 + $0x14] sm:$0xf]
    %v581 = vld [vmem:[#allocation8 + $0x18] sm:$0xf]
    %v582 = vld [vmem:[#allocation8 + $0x1c] sm:$0xf]
    %v583 = vld [vmem:[#allocation8 + $0x20] sm:$0xf]
    %v584 = vld [vmem:[#allocation8 + $0x24] sm:$0xf]
    %v585 = vld [vmem:[#allocation8 + $0x28] sm:$0xf]
    %v586 = vld [vmem:[#allocation8 + $0x2c] sm:$0xf]
    %v587 = vld [vmem:[#allocation8 + $0x30] sm:$0xf]
    %v588 = vld [vmem:[#allocation8 + $0x34] sm:$0xf]
    %v589 = vld [vmem:[#allocation8 + $0x38] sm:$0xf]
    %v590 = vld [vmem:[#allocation8 + $0x3c] sm:$0xf]
    %v591 = vld [vmem:[#allocation8 + $0x40] sm:$0xf]
    %v592 = vld [vmem:[#allocation8 + $0x44] sm:$0xf]
    %v593 = vld [vmem:[#allocation8 + $0x48] sm:$0xf]
    %v594 = vld [vmem:[#allocation8 + $0x4c] sm:$0xf]
    %v595 = vld [vmem:[#allocation8 + $0x50] sm:$0xf]
    %v596 = vld [vmem:[#allocation8 + $0x54] sm:$0xf]
    %v597 = vld [vmem:[#allocation8 + $0x58] sm:$0xf]
    %v598 = vld [vmem:[#allocation8 + $0x5c] sm:$0xf]
    %v599 = vld [vmem:[#allocation8 + $0x60] sm:$0xf]
    %v600 = vld [vmem:[#allocation8 + $0x64] sm:$0xf]
    %v601 = vld [vmem:[#allocation8 + $0x68] sm:$0xf]
    %v602 = vld [vmem:[#allocation8 + $0x6c] sm:$0xf]
    %v603 = vld [vmem:[#allocation8 + $0x70] sm:$0xf]
    %v604 = vld [vmem:[#allocation8 + $0x74] sm:$0xf]
    %v605 = vld [vmem:[#allocation8 + $0x78] sm:$0xf]
    %v606 = vld [vmem:[#allocation8 + $0x7c] sm:$0xf]
    %v607 = vld [vmem:[%s10] sm:$0x1]
    %v609 = vlaneseq
    %v610 = vshrl.u32 %v609, 7
    %v611 = vsub.s32 0, %v610
    %v612 = vrot.slane %v607, %v611
    %v646 = vunpack.c.l.b16 %v575
    %v647 = vunpack.c.l.b16 %v576
    %v648 = vunpack.c.l.b16 %v577
    %v649 = vunpack.c.l.b16 %v578
    %v650 = vunpack.c.l.b16 %v579
    %v651 = vunpack.c.l.b16 %v580
    %v652 = vunpack.c.l.b16 %v581
    %v653 = vunpack.c.l.b16 %v582
    %v654 = vunpack.c.l.b16 %v583
    %v655 = vunpack.c.l.b16 %v584
    %v656 = vunpack.c.l.b16 %v585
    %v657 = vunpack.c.l.b16 %v586
    %v658 = vunpack.c.l.b16 %v587
    %v659 = vunpack.c.l.b16 %v588
    %v660 = vunpack.c.l.b16 %v589
    %v661 = vunpack.c.l.b16 %v590
    %v662 = vunpack.c.l.b16 %v591
    %v663 = vunpack.c.l.b16 %v592
    %v664 = vunpack.c.l.b16 %v593
    %v665 = vunpack.c.l.b16 %v594
    %v666 = vunpack.c.l.b16 %v595
    %v667 = vunpack.c.l.b16 %v596
    %v668 = vunpack.c.l.b16 %v597
    %v669 = vunpack.c.l.b16 %v598
    %v670 = vunpack.c.l.b16 %v599
    %v671 = vunpack.c.l.b16 %v600
    %v672 = vunpack.c.l.b16 %v601
    %v673 = vunpack.c.l.b16 %v602
    %v674 = vunpack.c.l.b16 %v603
    %v675 = vunpack.c.l.b16 %v604
    %v676 = vunpack.c.l.b16 %v605
    %v677 = vunpack.c.l.b16 %v606
    %v678 = vpack.c.b16 %v647, %v646
    %v679 = vpack.c.b16 %v649, %v648
    %v680 = vpack.c.b16 %v651, %v650
    %v681 = vpack.c.b16 %v653, %v652
    %v682 = vpack.c.b16 %v655, %v654
    %v683 = vpack.c.b16 %v657, %v656
    %v684 = vpack.c.b16 %v659, %v658
    %v685 = vpack.c.b16 %v661, %v660
    %v686 = vpack.c.b16 %v663, %v662
    %v687 = vpack.c.b16 %v665, %v664
    %v688 = vpack.c.b16 %v667, %v666
    %v689 = vpack.c.b16 %v669, %v668
    %v690 = vpack.c.b16 %v671, %v670
    %v691 = vpack.c.b16 %v673, %v672
    %v692 = vpack.c.b16 %v675, %v674
    %v693 = vpack.c.b16 %v677, %v676
    %710 = vmatprep.subr.bf16.mxu0 0
    %711 = vmatpush1.bf16.msra.mxu0 %v678
    %712 = vmatprep.subr.bf16.mxu0 0
    %713 = vmatpush1.bf16.msra.mxu0 %v679
    %714 = vmatprep.subr.bf16.mxu0 0
    %715 = vmatpush1.bf16.msra.mxu0 %v680
    %716 = vmatprep.subr.bf16.mxu0 0
    %717 = vmatpush1.bf16.msra.mxu0 %v681
    %718 = vmatprep.subr.bf16.mxu0 0
    %719 = vmatpush1.bf16.msra.mxu0 %v682
    %720 = vmatprep.subr.bf16.mxu0 0
    %721 = vmatpush1.bf16.msra.mxu0 %v683
    %722 = vmatprep.subr.bf16.mxu0 0
    %723 = vmatpush1.bf16.msra.mxu0 %v684
    %724 = vmatprep.subr.bf16.mxu0 0
    %725 = vmatpush1.bf16.msra.mxu0 %v685
    %726 = vmatprep.subr.bf16.mxu0 0
    %727 = vmatpush1.bf16.msra.mxu0 %v686
    %728 = vmatprep.subr.bf16.mxu0 0
    %729 = vmatpush1.bf16.msra.mxu0 %v687
    %730 = vmatprep.subr.bf16.mxu0 0
    %731 = vmatpush1.bf16.msra.mxu0 %v688
    %732 = vmatprep.subr.bf16.mxu0 0
    %733 = vmatpush1.bf16.msra.mxu0 %v689
    %734 = vmatprep.subr.bf16.mxu0 0
    %735 = vmatpush1.bf16.msra.mxu0 %v690
    %736 = vmatprep.subr.bf16.mxu0 0
    %737 = vmatpush1.bf16.msra.mxu0 %v691
    %738 = vmatprep.subr.bf16.mxu0 0
    %739 = vmatpush1.bf16.msra.mxu0 %v692
    %740 = vmatprep.subr.bf16.mxu0 0
    %741 = vmatpush1.bf16.msra.mxu0 %v693
    %742 = vmatprep.mubr.bf16.mxu0 %v574
    %743 = vmatmul.mubr.bf16.gmra.mrb[0].mxu0 %v573
    %v744 = vpop.f32.mrb[0].mxu0
    %v745 = vadd.f32 %v612, %v744
    %v746 = vpop.f32.mrb[0].mxu0
    %v747 = vpop.f32.mrb[0].mxu0
    %v748 = vpop.f32.mrb[0].mxu0
    %749 = vdwg.mxu0
    %v750 = vpack.c.bf16 %v745, %v745
    %751 = vmatprep.subr.bf16.mxu0 0
    %752 = vmatpush1.bf16.msra.mxu0 1065369472
    %753 = vmatprep.subr.bf16.mxu0 0
    %754 = vmatpush1.bf16.msra.mxu0 1065369472
    %755 = vmatprep.subr.bf16.mxu0 0
    %756 = vmatpush1.bf16.msra.mxu0 1065369472
    %757 = vmatprep.subr.bf16.mxu0 0
    %758 = vmatpush1.bf16.msra.mxu0 1065369472
    %759 = vmatprep.subr.bf16.mxu0 0
    %760 = vmatpush1.bf16.msra.mxu0 1065369472
    %761 = vmatprep.subr.bf16.mxu0 0
    %762 = vmatpush1.bf16.msra.mxu0 1065369472
    %763 = vmatprep.subr.bf16.mxu0 0
    %764 = vmatpush1.bf16.msra.mxu0 1065369472
    %765 = vmatprep.subr.bf16.mxu0 0
    %766 = vmatpush1.bf16.msra.mxu0 1065369472
    %767 = vmatprep.subr.bf16.mxu0 0
    %768 = vmatpush1.bf16.msra.mxu0 0
    %769 = vmatprep.subr.bf16.mxu0 0
    %770 = vmatpush1.bf16.msra.mxu0 0
    %771 = vmatprep.subr.bf16.mxu0 0
    %772 = vmatpush1.bf16.msra.mxu0 0
    %773 = vmatprep.subr.bf16.mxu0 0
    %774 = vmatpush1.bf16.msra.mxu0 0
    %775 = vmatprep.subr.bf16.mxu0 0
    %776 = vmatpush1.bf16.msra.mxu0 0
    %777 = vmatprep.subr.bf16.mxu0 0
    %778 = vmatpush1.bf16.msra.mxu0 0
    %779 = vmatprep.subr.bf16.mxu0 0
    %780 = vmatpush1.bf16.msra.mxu0 0
    %781 = vmatprep.subr.bf16.mxu0 0
    %782 = vmatpush1.bf16.msra.mxu0 0
    %783 = vmatprep.mubr.bf16.mxu0 0
    %784 = vmatmul.mubr.bf16.gmra.mrb[0].mxu0 %v750
    %v785 = vpop.f32.mrb[0].mxu0
    %v786 = vadd.f32 0.0, %v785
    %v787 = vpop.f32.mrb[0].mxu0
    %v788 = vpop.f32.mrb[0].mxu0
    %v789 = vpop.f32.mrb[0].mxu0
    %790 = vdwg.mxu0
    %v791 = vmul.f32 %v786, 0.0078125
    %v792 = vsub.f32 %v745, %v791
    %v793 = vmul.f32 %v792, %v792
    %v794 = vpack.c.bf16 %v793, %v793
    %795 = vmatprep.subr.bf16.mxu0 0
    %796 = vmatpush1.bf16.msra.mxu0 1065369472
    %797 = vmatprep.subr.bf16.mxu0 0
    %798 = vmatpush1.bf16.msra.mxu0 1065369472
    %799 = vmatprep.subr.bf16.mxu0 0
    %800 = vmatpush1.bf16.msra.mxu0 1065369472
    %801 = vmatprep.subr.bf16.mxu0 0
    %802 = vmatpush1.bf16.msra.mxu0 1065369472
    %803 = vmatprep.subr.bf16.mxu0 0
    %804 = vmatpush1.bf16.msra.mxu0 1065369472
    %805 = vmatprep.subr.bf16.mxu0 0
    %806 = vmatpush1.bf16.msra.mxu0 1065369472
    %807 = vmatprep.subr.bf16.mxu0 0
    %808 = vmatpush1.bf16.msra.mxu0 1065369472
    %809 = vmatprep.subr.bf16.mxu0 0
    %810 = vmatpush1.bf16.msra.mxu0 1065369472
    %811 = vmatprep.subr.bf16.mxu0 0
    %812 = vmatpush1.bf16.msra.mxu0 0
    %813 = vmatprep.subr.bf16.mxu0 0
    %814 = vmatpush1.bf16.msra.mxu0 0
    %815 = vmatprep.subr.bf16.mxu0 0
    %816 = vmatpush1.bf16.msra.mxu0 0
    %817 = vmatprep.subr.bf16.mxu0 0
    %818 = vmatpush1.bf16.msra.mxu0 0
    %819 = vmatprep.subr.bf16.mxu0 0
    %820 = vmatpush1.bf16.msra.mxu0 0
    %821 = vmatprep.subr.bf16.mxu0 0
    %822 = vmatpush1.bf16.msra.mxu0 0
    %823 = vmatprep.subr.bf16.mxu0 0
    %824 = vmatpush1.bf16.msra.mxu0 0
    %825 = vmatprep.subr.bf16.mxu0 0
    %826 = vmatpush1.bf16.msra.mxu0 0
    %827 = vmatprep.mubr.bf16.mxu0 0
    %828 = vmatmul.mubr.bf16.gmra.mrb[0].mxu0 %v794
    %v829 = vpop.f32.mrb[0].mxu0
    %v830 = vadd.f32 0.0, %v829
    %v831 = vpop.f32.mrb[0].mxu0
    %v832 = vpop.f32.mrb[0].mxu0
    %v833 = vpop.f32.mrb[0].mxu0
    %834 = vdwg.mxu0
    %v835 = vmul.f32 %v830, 0.0078125
    %v836 = vadd.f32 %v835, 1e-05
    %v837 = vrsqrt.pop %v836
    %v838 = vmul.f32 %v792, %v837
    %v839 = vld [vmem:[%s11] sm:$0x1]
    %v841 = vlaneseq
    %v842 = vshrl.u32 %v841, 7
    %v843 = vsub.s32 0, %v842
    %v844 = vrot.slane %v839, %v843
    %v846 = vmul.f32 %v838, %v844
    %v847 = vld [vmem:[%s12] sm:$0x1]
    %v849 = vlaneseq
    %v850 = vshrl.u32 %v849, 7
    %v851 = vsub.s32 0, %v850
    %v852 = vrot.slane %v847, %v851
    %v854 = vadd.f32 %v846, %v852
    %v855 = vmax.f32 %v854, 0.0
    %v856 = vpack.c.bf16 %v855, %v855
    %v857 = vld [vmem:[#allocation10] sm:$0xff]
    %v858 = vld [vmem:[#allocation10 + $0x8] sm:$0xff]
    %v859 = vld [vmem:[#allocation10 + $0x10] sm:$0xff]
    %v860 = vld [vmem:[#allocation10 + $0x18] sm:$0xff]
    %v861 = vld [vmem:[#allocation10 + $0x20] sm:$0xff]
    %v862 = vld [vmem:[#allocation10 + $0x28] sm:$0xff]
    %v863 = vld [vmem:[#allocation10 + $0x30] sm:$0xff]
    %v864 = vld [vmem:[#allocation10 + $0x38] sm:$0xff]
    %v865 = vld [vmem:[#allocation10 + $0x40] sm:$0xff]
    %v866 = vld [vmem:[#allocation10 + $0x48] sm:$0xff]
    %v867 = vld [vmem:[#allocation10 + $0x50] sm:$0xff]
    %v868 = vld [vmem:[#allocation10 + $0x58] sm:$0xff]
    %v869 = vld [vmem:[#allocation10 + $0x60] sm:$0xff]
    %v870 = vld [vmem:[#allocation10 + $0x68] sm:$0xff]
    %v871 = vld [vmem:[#allocation10 + $0x70] sm:$0xff]
    %v872 = vld [vmem:[#allocation10 + $0x78] sm:$0xff]
    %v873 = vld [vmem:[%s14] sm:$0x3]
    %v875 = vlaneseq
    %v876 = vshrl.u32 %v875, 7
    %v877 = vsub.s32 0, %v876
    %v878 = vrot.slane %v873, %v877
    %v879 = vlaneseq
    %v880 = vshrl.u32 %v879, 7
    %v881 = vsub.s32 1, %v880
    %v882 = vrot.slane %v873, %v881
    %v901 = vunpack.c.l.b16 %v857
    %v902 = vunpack.c.h.b16 %v857
    %v903 = vunpack.c.l.b16 %v858
    %v904 = vunpack.c.h.b16 %v858
    %v905 = vunpack.c.l.b16 %v859
    %v906 = vunpack.c.h.b16 %v859
    %v907 = vunpack.c.l.b16 %v860
    %v908 = vunpack.c.h.b16 %v860
    %v909 = vunpack.c.l.b16 %v861
    %v910 = vunpack.c.h.b16 %v861
    %v911 = vunpack.c.l.b16 %v862
    %v912 = vunpack.c.h.b16 %v862
    %v913 = vunpack.c.l.b16 %v863
    %v914 = vunpack.c.h.b16 %v863
    %v915 = vunpack.c.l.b16 %v864
    %v916 = vunpack.c.h.b16 %v864
    %v917 = vunpack.c.l.b16 %v865
    %v918 = vunpack.c.h.b16 %v865
    %v919 = vunpack.c.l.b16 %v866
    %v920 = vunpack.c.h.b16 %v866
    %v921 = vunpack.c.l.b16 %v867
    %v922 = vunpack.c.h.b16 %v867
    %v923 = vunpack.c.l.b16 %v868
    %v924 = vunpack.c.h.b16 %v868
    %v925 = vunpack.c.l.b16 %v869
    %v926 = vunpack.c.h.b16 %v869
    %v927 = vunpack.c.l.b16 %v870
    %v928 = vunpack.c.h.b16 %v870
    %v929 = vunpack.c.l.b16 %v871
    %v930 = vunpack.c.h.b16 %v871
    %v931 = vunpack.c.l.b16 %v872
    %v932 = vunpack.c.h.b16 %v872
    %v933 = vpack.c.b16 %v903, %v901
    %v934 = vpack.c.b16 %v904, %v902
    %v935 = vpack.c.b16 %v907, %v905
    %v936 = vpack.c.b16 %v908, %v906
    %v937 = vpack.c.b16 %v911, %v909
    %v938 = vpack.c.b16 %v912, %v910
    %v939 = vpack.c.b16 %v915, %v913
    %v940 = vpack.c.b16 %v916, %v914
    %v941 = vpack.c.b16 %v919, %v917
    %v942 = vpack.c.b16 %v920, %v918
    %v943 = vpack.c.b16 %v923, %v921
    %v944 = vpack.c.b16 %v924, %v922
    %v945 = vpack.c.b16 %v927, %v925
    %v946 = vpack.c.b16 %v928, %v926
    %v947 = vpack.c.b16 %v931, %v929
    %v948 = vpack.c.b16 %v932, %v930
    %965 = vmatprep.subr.bf16.mxu0 %v934
    %966 = vmatpush1.bf16.msra.mxu0 %v933
    %967 = vmatprep.subr.bf16.mxu0 %v936
    %968 = vmatpush1.bf16.msra.mxu0 %v935
    %969 = vmatprep.subr.bf16.mxu0 %v938
    %970 = vmatpush1.bf16.msra.mxu0 %v937
    %971 = vmatprep.subr.bf16.mxu0 %v940
    %972 = vmatpush1.bf16.msra.mxu0 %v939
    %973 = vmatprep.subr.bf16.mxu0 %v942
    %974 = vmatpush1.bf16.msra.mxu0 %v941
    %975 = vmatprep.subr.bf16.mxu0 %v944
    %976 = vmatpush1.bf16.msra.mxu0 %v943
    %977 = vmatprep.subr.bf16.mxu0 %v946
    %978 = vmatpush1.bf16.msra.mxu0 %v945
    %979 = vmatprep.subr.bf16.mxu0 %v948
    %980 = vmatpush1.bf16.msra.mxu0 %v947
    %981 = vmatprep.subr.bf16.mxu0 0
    %982 = vmatpush1.bf16.msra.mxu0 0
    %983 = vmatprep.subr.bf16.mxu0 0
    %984 = vmatpush1.bf16.msra.mxu0 0
    %985 = vmatprep.subr.bf16.mxu0 0
    %986 = vmatpush1.bf16.msra.mxu0 0
    %987 = vmatprep.subr.bf16.mxu0 0
    %988 = vmatpush1.bf16.msra.mxu0 0
    %989 = vmatprep.subr.bf16.mxu0 0
    %990 = vmatpush1.bf16.msra.mxu0 0
    %991 = vmatprep.subr.bf16.mxu0 0
    %992 = vmatpush1.bf16.msra.mxu0 0
    %993 = vmatprep.subr.bf16.mxu0 0
    %994 = vmatpush1.bf16.msra.mxu0 0
    %995 = vmatprep.subr.bf16.mxu0 0
    %996 = vmatpush1.bf16.msra.mxu0 0
    %997 = vmatprep.mubr.bf16.mxu0 0
    %998 = vmatmul.mubr.bf16.gmra.mrb[0].mxu0 %v856
    %v999 = vpop.f32.mrb[0].mxu0
    %v1000 = vadd.f32 %v878, %v999
    %v1001 = vpop.f32.mrb[0].mxu0
    %v1002 = vadd.f32 %v882, %v1001
    %v1003 = vpop.f32.mrb[0].mxu0
    %v1004 = vpop.f32.mrb[0].mxu0
    %1005 = vdwg.mxu0
    %1006 = vst [vmem:[#allocation11] sm:$0xff] %v1000
    %1007 = vst [vmem:[#allocation11 + $0x8] sm:$0xff] %v1002
    // Predicated region
    $region82: #{tpu_custom_call.1} parent=1 // pred_check
      _
    $region83: #{tpu_custom_call.1} parent=1 // pred_check_branch
      %1009 = sbr.rel (0) target = $region85
    $region84: #{tpu_custom_call.1} parent=1 // pred_region
      %s1011 = ssub.s32 256, 256
      %1012 = vsyncadd [#allocation4], %s1011
      %s1014 = sshll.u32 [#allocation11], 4
      %s1015 = int_to_ptr.vmem [resolvable:$true] %s1014
      %1017 = dma.vmem_to_hbm [thread:$0]  %s1015, 256, %s15, [#allocation4]
    $region85: #{tpu_custom_call.1} parent=1 // pred_fallthru
      _
    // Predicated region
    $region86: #{tpu_custom_call.1} parent=1 // pred_check
      _
    $region87: #{tpu_custom_call.1} parent=1 // pred_check_branch
      %1019 = sbr.rel (0) target = $region89
    $region88: #{tpu_custom_call.1} parent=1 // pred_region
      %1020 = dma.done [#allocation4], 256
    $region89: #{tpu_custom_call.1} parent=1 // pred_fallthru
      _
    %1021 = vsyncpa [#allocation3], 1
    %1022 = vsyncpa [#allocation6], 1
    %1023 = vsyncpa [#allocation9], 1
    %1024 = vsyncpa [#allocation4], 1

</llo_original>
